<compile_context>
chip_gen: v6e
topology: v6e:2x2x1
jax: 0.10.0
libtpu: 0.0.40
codegen_flags: <defaults>
</compile_context>

<pallas_src>
import functools

import jax
import jax.numpy as jnp
from jax.experimental import pallas as pl
from jax.experimental.pallas import tpu as pltpu


def _round_up(x: int, m: int) -> int:
    return (x + m - 1) // m * m


def _qil_kernel(x_ref, g2t_ref, g1t_ref, bias_ref, o_ref):
    # t = x @ G2.T : (bm, in_p) @ (in_p, r) -> (bm, r)   [tiny N, cheap]
    t = jnp.dot(x_ref[...], g2t_ref[...], preferred_element_type=jnp.float32)
    # y = t @ G1.T : (bm, r) @ (r, bn) -> (bm, bn)       [lane-dense output]
    y = jnp.dot(t.astype(g1t_ref.dtype), g1t_ref[...],
                preferred_element_type=jnp.float32)
    # f32 bias add, single cast epilogue.
    o_ref[...] = (y + bias_ref[...].astype(jnp.float32)).astype(o_ref.dtype)


@functools.partial(jax.jit, static_argnames=("compute_dtype",))
def quantum_inspired_linear(x, g1, g2, bias, *, compute_dtype=jnp.float32):
    """x: (B, in), g1: (out, rank), g2: (rank, in), bias: (out,) -> (B, out).

    Computes x @ (g1 @ g2).T + bias without ever forming the (out, in) weight.
    Set compute_dtype=jnp.bfloat16 on v6e/v7x for MXU throughput (f32 accum).
    """
    B, in_f = x.shape
    out_f, rank = g1.shape
    assert g2.shape == (rank, in_f)
    assert bias.shape == (out_f,)

    cdt = jnp.dtype(compute_dtype)
    out_dtype = x.dtype

    # Lane-dense padding of the contracted / output feature dims.
    in_p = _round_up(in_f, 128)
    out_p = _round_up(out_f, 128)

    # Tile sizes: batch tile a multiple of 8 sublanes (16 if bf16), output tile
    # a multiple of 128 lanes; keep tiles modest so they fit v7x's 64 MiB VMEM
    # with double-buffering.
    sub = 16 if cdt == jnp.bfloat16 else 8
    bm = min(256, _round_up(B, sub))
    B_p = _round_up(B, bm)
    bn = min(512, out_p)
    while out_p % bn != 0:
        bn -= 128

    # Zero-padded, pre-transposed operands (padded lanes/rows are zero so they
    # contribute nothing; padded output lanes are sliced off below).
    xp = jnp.zeros((B_p, in_p), cdt).at[:B, :in_f].set(x.astype(cdt))
    g2t = jnp.zeros((in_p, rank), cdt).at[:in_f, :].set(g2.T.astype(cdt))
    g1t = jnp.zeros((rank, out_p), cdt).at[:, :out_f].set(g1.T.astype(cdt))
    bias2d = jnp.zeros((1, out_p), jnp.float32).at[0, :out_f].set(
        bias.astype(jnp.float32))

    # Rough VMEM budget: double-buffered input/output tiles + headroom,
    # capped below v7x's 64 MiB physical VMEM.
    elt = cdt.itemsize
    tile_bytes = ((bm * in_p + in_p * rank + rank * bn) * elt
                  + bn * 4 + bm * bn * jnp.dtype(out_dtype).itemsize)
    vmem_limit = int(min(48 * 2**20, max(16 * 2**20, 2 * tile_bytes + (4 << 20))))

    grid = (B_p // bm, out_p // bn)

    out_padded = pl.pallas_call(
        _qil_kernel,
        out_shape=jax.ShapeDtypeStruct((B_p, out_p), out_dtype),
        grid_spec=pltpu.PrefetchScalarGridSpec(
            num_scalar_prefetch=0,
            grid=grid,
            in_specs=[
                pl.BlockSpec((bm, in_p), lambda i, j: (i, 0)),      # x tile
                pl.BlockSpec((in_p, rank), lambda i, j: (0, 0)),    # G2.T (whole)
                pl.BlockSpec((rank, bn), lambda i, j: (0, j)),      # G1.T tile
                pl.BlockSpec((1, bn), lambda i, j: (0, j)),         # bias tile
            ],
            out_specs=pl.BlockSpec((bm, bn), lambda i, j: (i, j)),
        ),
        compiler_params=pltpu.CompilerParams(
            dimension_semantics=("parallel", "parallel"),
            vmem_limit_bytes=vmem_limit,
        ),
    )(xp, g2t, g1t, bias2d)

    return out_padded[:B, :out_f]


if __name__ == "__main__":
    in_features = 32
    out_features = 16
    rank = 4
    batch = 8

    key = jax.random.PRNGKey(0)
    kx, k1, k2, kb = jax.random.split(key, 4)

    # Deterministic synthetic parameters mirroring the module's init:
    # TT cores (boundary ranks of 1 squeezed) and bias = randn * 0.02.
    x = jax.random.normal(kx, (batch, in_features), dtype=jnp.float32)
    g1 = jax.random.normal(k1, (out_features, rank), dtype=jnp.float32) * 0.1
    g2 = jax.random.normal(k2, (rank, in_features), dtype=jnp.float32) * 0.1
    bias = jax.random.normal(kb, (out_features,), dtype=jnp.float32) * 0.02

    y = quantum_inspired_linear(x, g1, g2, bias)
    y = jax.block_until_ready(y)

    # Pure-JAX reference of the module semantics: weight = g1 @ g2; x @ w.T + b.
    w_ref = g1 @ g2
    y_ref = x @ w_ref.T + bias
    assert y.shape == (batch, out_features)
    assert jnp.allclose(y, y_ref, atol=1e-5, rtol=1e-5)

    print("KERNEL_OK")
</pallas_src>

<mosaic_0001>
module attributes {stable_mosaic.version = 11 : i64} {
  func.func @_qil_kernel(%arg0: i32, %arg1: i32, %arg2: memref<8x128xf32, #tpu.memory_space<vmem>>, %arg3: memref<128x4xf32, #tpu.memory_space<vmem>>, %arg4: memref<4x128xf32, #tpu.memory_space<vmem>>, %arg5: memref<1x128xf32, #tpu.memory_space<vmem>>, %arg6: memref<8x128xf32, #tpu.memory_space<vmem>>) attributes {dimension_semantics = [#tpu.dimension_semantics<parallel>, #tpu.dimension_semantics<parallel>], iteration_bounds = array<i64: 1, 1>, scalar_prefetch = 0 : i64, scratch_operands = 0 : i64, tpu.core_type = #tpu.core_type<tc>, window_params = [{transform_indices = @transform_0, window_bounds = array<i64: 8, 128>}, {pipeline_mode = #tpu.pipeline_mode<synchronous>, transform_indices = @transform_1, window_bounds = array<i64: 128, 4>}, {transform_indices = @transform_2, window_bounds = array<i64: 4, 128>}, {transform_indices = @transform_3, window_bounds = array<i64: 1, 128>}, {transform_indices = @transform_4, window_bounds = array<i64: 8, 128>}]} {
    %c0 = arith.constant 0 : index
    %c0_0 = arith.constant 0 : index
    %0 = vector.load %arg2[%c0, %c0_0] : memref<8x128xf32, #tpu.memory_space<vmem>>, vector<8x128xf32>
    %c0_1 = arith.constant 0 : index
    %c0_2 = arith.constant 0 : index
    %1 = vector.load %arg3[%c0_1, %c0_2] : memref<128x4xf32, #tpu.memory_space<vmem>>, vector<128x4xf32>
    %cst = arith.constant dense<0.000000e+00> : vector<8x4xf32>
    %2 = tpu.matmul %0, %1, %cst {dimension_numbers = #tpu.dot_dimension_numbers<[1], [0], [0], [1], [0, 0, 1, 1], [], []>} : vector<8x128xf32>, vector<128x4xf32>, vector<8x4xf32> -> vector<8x4xf32>
    %c0_3 = arith.constant 0 : index
    %c0_4 = arith.constant 0 : index
    %3 = vector.load %arg4[%c0_3, %c0_4] : memref<4x128xf32, #tpu.memory_space<vmem>>, vector<4x128xf32>
    %cst_5 = arith.constant dense<0.000000e+00> : vector<8x128xf32>
    %4 = tpu.matmul %2, %3, %cst_5 {dimension_numbers = #tpu.dot_dimension_numbers<[1], [0], [0], [1], [0, 0, 1, 1], [], []>} : vector<8x4xf32>, vector<4x128xf32>, vector<8x128xf32> -> vector<8x128xf32>
    %c0_6 = arith.constant 0 : index
    %c0_7 = arith.constant 0 : index
    %5 = vector.load %arg5[%c0_6, %c0_7] : memref<1x128xf32, #tpu.memory_space<vmem>>, vector<1x128xf32>
    %6 = vector.broadcast %5 : vector<1x128xf32> to vector<8x128xf32>
    %7 = arith.addf %4, %6 : vector<8x128xf32>
    %c0_8 = arith.constant 0 : index
    %c0_9 = arith.constant 0 : index
    %8 = vector.load %arg6[%c0_8, %c0_9] : memref<8x128xf32, #tpu.memory_space<vmem>>, vector<8x128xf32>
    tpu.vector_store %arg6[%c0_8, %c0_9], %7 {strides = array<i32>} : memref<8x128xf32, #tpu.memory_space<vmem>>, vector<8x128xf32>,
    return
  }
  func.func @transform_0(%arg0: i32, %arg1: i32) -> (i32, i32) {
    %c0_i32 = arith.constant 0 : i32
    %c0_i32_0 = arith.constant 0 : i32
    return %arg0, %c0_i32 : i32, i32
  }
  func.func @transform_1(%arg0: i32, %arg1: i32) -> (i32, i32) {
    %c0_i32 = arith.constant 0 : i32
    %c0_i32_0 = arith.constant 0 : i32
    %c0_i32_1 = arith.constant 0 : i32
    return %c0_i32, %c0_i32_0 : i32, i32
  }
  func.func @transform_2(%arg0: i32, %arg1: i32) -> (i32, i32) {
    %c0_i32 = arith.constant 0 : i32
    %c0_i32_0 = arith.constant 0 : i32
    return %c0_i32, %arg1 : i32, i32
  }
  func.func @transform_3(%arg0: i32, %arg1: i32) -> (i32, i32) {
    %c0_i32 = arith.constant 0 : i32
    %c0_i32_0 = arith.constant 0 : i32
    return %c0_i32, %arg1 : i32, i32
  }
  func.func @transform_4(%arg0: i32, %arg1: i32) -> (i32, i32) {
    %c0_i32 = arith.constant 0 : i32
    return %arg0, %arg1 : i32, i32
  }
}

</mosaic_0001>

<llo_original>
// kernel: quantum_inspired_linear.1
$region0: #{quantum_inspired_linear.1}
  #allocation0 [shape = 'u32[]', space=smem, size = 0x4, offset = 0x4, fixed_abs, tag = 'smem constant byte address 0x4 - core index']
  #allocation1 [shape = 'u32[144,128]{1,0:T(1,128)}', space=vmem, size = 0x12000, scoped, tag = 'internal scratch']
  %s0 = inlined_call_operand.vmem [shape: f32[8,128], index: 0, kind: input, shape index: {}]
  %s1 = inlined_call_operand.vmem [shape: f32[128,4], index: 1, kind: input, shape index: {}]
  %s2 = inlined_call_operand.vmem [shape: f32[4,128], index: 2, kind: input, shape index: {}]
  %s3 = inlined_call_operand.vmem [shape: f32[1,128], index: 3, kind: input, shape index: {}]
  %s4 = inlined_call_operand.hbm [shape: f32[8,128], index: 4, kind: output, shape index: {}]
  %s5 = sld [smem:[#allocation0]]
  $region26: #{quantum_inspired_linear.1} parent=0
    _
  %s7 = ssub.s32 1, %s5
  %s8 = scalar_select 0, %s7, %s5
  $region1: #{quantum_inspired_linear.1} parent=0
    #allocation2 [shape = 'u8[4096]{0}', space=vmem, size = 0x1000, scoped, tag = 'output window, operand 0, single buffered']
    #allocation3 [shape = 's32[1]{0}', space=sflag, size = 0x4, scoped, tag = 'scoped memory for quantum_inspired_linear.1']
    %9 = vsyncpa [#allocation3], 0
    // Predicated region
    $region2: #{quantum_inspired_linear.1} parent=1 // pred_check
      _
    $region3: #{quantum_inspired_linear.1} parent=1 // pred_check_branch
      %11 = sbr.rel (0) target = $region5
    $region4: #{quantum_inspired_linear.1} parent=1 // pred_region
      _
    $region5: #{quantum_inspired_linear.1} parent=1 // pred_fallthru
      _
    // Predicated region
    $region6: #{quantum_inspired_linear.1} parent=1 // pred_check
      _
    $region7: #{quantum_inspired_linear.1} parent=1 // pred_check_branch
      %13 = sbr.rel (0) target = $region9
    $region8: #{quantum_inspired_linear.1} parent=1 // pred_region
      _
    $region9: #{quantum_inspired_linear.1} parent=1 // pred_fallthru
      _
    // Predicated region
    $region10: #{quantum_inspired_linear.1} parent=1 // pred_check
      _
    $region11: #{quantum_inspired_linear.1} parent=1 // pred_check_branch
      %15 = sbr.rel (0) target = $region13
    $region12: #{quantum_inspired_linear.1} parent=1 // pred_region
      _
    $region13: #{quantum_inspired_linear.1} parent=1 // pred_fallthru
      _
    // Predicated region
    $region14: #{quantum_inspired_linear.1} parent=1 // pred_check
      _
    $region15: #{quantum_inspired_linear.1} parent=1 // pred_check_branch
      %17 = sbr.rel (0) target = $region17
    $region16: #{quantum_inspired_linear.1} parent=1 // pred_region
      _
    $region17: #{quantum_inspired_linear.1} parent=1 // pred_fallthru
      _
    %v18 = vld [vmem:[%s0] sm:$0xff]
    %v19 = vld [vmem:[%s1] sm:$0xff]
    %v20 = vld [vmem:[%s1 + $0x8] sm:$0xff]
    %v21 = vld [vmem:[%s1 + $0x10] sm:$0xff]
    %v22 = vld [vmem:[%s1 + $0x18] sm:$0xff]
    %v23 = vld [vmem:[%s1 + $0x20] sm:$0xff]
    %v24 = vld [vmem:[%s1 + $0x28] sm:$0xff]
    %v25 = vld [vmem:[%s1 + $0x30] sm:$0xff]
    %v26 = vld [vmem:[%s1 + $0x38] sm:$0xff]
    %v27 = vld [vmem:[%s1 + $0x40] sm:$0xff]
    %v28 = vld [vmem:[%s1 + $0x48] sm:$0xff]
    %v29 = vld [vmem:[%s1 + $0x50] sm:$0xff]
    %v30 = vld [vmem:[%s1 + $0x58] sm:$0xff]
    %v31 = vld [vmem:[%s1 + $0x60] sm:$0xff]
    %v32 = vld [vmem:[%s1 + $0x68] sm:$0xff]
    %v33 = vld [vmem:[%s1 + $0x70] sm:$0xff]
    %v34 = vld [vmem:[%s1 + $0x78] sm:$0xff]
    %35 = vmatprep.subr.mxu0 0.0
    %36 = vmatpush1.msra.mxu0 %v34
    %37 = vmatprep.subr.mxu0 0.0
    %38 = vmatpush1.msra.mxu0 %v33
    %39 = vmatprep.subr.mxu0 0.0
    %40 = vmatpush1.msra.mxu0 %v32
    %41 = vmatprep.subr.mxu0 0.0
    %42 = vmatpush1.msra.mxu0 %v31
    %43 = vmatprep.subr.mxu0 0.0
    %44 = vmatpush1.msra.mxu0 %v30
    %45 = vmatprep.subr.mxu0 0.0
    %46 = vmatpush1.msra.mxu0 %v29
    %47 = vmatprep.subr.mxu0 0.0
    %48 = vmatpush1.msra.mxu0 %v28
    %49 = vmatprep.subr.mxu0 0.0
    %50 = vmatpush1.msra.mxu0 %v27
    %51 = vmatprep.subr.mxu0 0.0
    %52 = vmatpush1.msra.mxu0 %v26
    %53 = vmatprep.subr.mxu0 0.0
    %54 = vmatpush1.msra.mxu0 %v25
    %55 = vmatprep.subr.mxu0 0.0
    %56 = vmatpush1.msra.mxu0 %v24
    %57 = vmatprep.subr.mxu0 0.0
    %58 = vmatpush1.msra.mxu0 %v23
    %59 = vmatprep.subr.mxu0 0.0
    %60 = vmatpush1.msra.mxu0 %v22
    %61 = vmatprep.subr.mxu0 0.0
    %62 = vmatpush1.msra.mxu0 %v21
    %63 = vmatprep.subr.mxu0 0.0
    %64 = vmatpush1.msra.mxu0 %v20
    %65 = vmatprep.subr.mxu0 0.0
    %66 = vmatpush1.msra.mxu0 %v19
    %67 = vmatprep.subr.mxu0 0.0
    %68 = vmatpush2.msra.mxu0 0.0
    %69 = vmatprep.subr.mxu0 0.0
    %70 = vmatpush2.msra.mxu0 0.0
    %71 = vmatprep.subr.mxu0 0.0
    %72 = vmatpush2.msra.mxu0 0.0
    %73 = vmatprep.subr.mxu0 0.0
    %74 = vmatpush2.msra.mxu0 0.0
    %75 = vmatprep.subr.mxu0 0.0
    %76 = vmatpush2.msra.mxu0 0.0
    %77 = vmatprep.subr.mxu0 0.0
    %78 = vmatpush2.msra.mxu0 0.0
    %79 = vmatprep.subr.mxu0 0.0
    %80 = vmatpush2.msra.mxu0 0.0
    %81 = vmatprep.subr.mxu0 0.0
    %82 = vmatpush2.msra.mxu0 0.0
    %83 = vmatprep.subr.mxu0 0.0
    %84 = vmatpush2.msra.mxu0 0.0
    %85 = vmatprep.subr.mxu0 0.0
    %86 = vmatpush2.msra.mxu0 0.0
    %87 = vmatprep.subr.mxu0 0.0
    %88 = vmatpush2.msra.mxu0 0.0
    %89 = vmatprep.subr.mxu0 0.0
    %90 = vmatpush2.msra.mxu0 0.0
    %91 = vmatprep.subr.mxu0 0.0
    %92 = vmatpush2.msra.mxu0 0.0
    %93 = vmatprep.subr.mxu0 0.0
    %94 = vmatpush2.msra.mxu0 0.0
    %95 = vmatprep.subr.mxu0 0.0
    %96 = vmatpush2.msra.mxu0 0.0
    %97 = vmatprep.subr.mxu0 0.0
    %98 = vmatpush2.msra.mxu0 0.0
    %99 = vmatprep.mubr.f32.mxu0 0.0
    %100 = vmatmul.mubr.f32.gmra.mxu0 %v18
    %v101 = vpop.f32.mrf.mxu0
    %v102 = vadd.f32 0.0, %v101
    %v103 = vpop.f32.mrf.mxu0
    %104 = vdwg.mxu0
    %v105 = vld [vmem:[%s2] sm:$0xf]
    %v106 = vld [vmem:[%s3] sm:$0x1]
    %v108 = vlaneseq
    %v109 = vshrl.u32 %v108, 7
    %v110 = vsub.s32 0, %v109
    %v111 = vrot.slane %v106, %v110
    %vm113 = vcmask 31744
    %v115 = vsel %vm113, %v102, 0
    %vm117 = vcmask 1043456
    %v119 = vsel %vm117, %v105, 0
    %121 = vmatprep.subr.mxu0 0.0
    %122 = vmatpush1.msra.mxu0 0.0
    %123 = vmatprep.subr.mxu0 0.0
    %124 = vmatpush1.msra.mxu0 0.0
    %125 = vmatprep.subr.mxu0 0.0
    %126 = vmatpush1.msra.mxu0 0.0
    %127 = vmatprep.subr.mxu0 0.0
    %128 = vmatpush1.msra.mxu0 0.0
    %129 = vmatprep.subr.mxu0 0.0
    %130 = vmatpush1.msra.mxu0 0.0
    %131 = vmatprep.subr.mxu0 0.0
    %132 = vmatpush1.msra.mxu0 0.0
    %133 = vmatprep.subr.mxu0 0.0
    %134 = vmatpush1.msra.mxu0 0.0
    %135 = vmatprep.subr.mxu0 0.0
    %136 = vmatpush1.msra.mxu0 0.0
    %137 = vmatprep.subr.mxu0 0.0
    %138 = vmatpush1.msra.mxu0 0.0
    %139 = vmatprep.subr.mxu0 0.0
    %140 = vmatpush1.msra.mxu0 0.0
    %141 = vmatprep.subr.mxu0 0.0
    %142 = vmatpush1.msra.mxu0 0.0
    %143 = vmatprep.subr.mxu0 0.0
    %144 = vmatpush1.msra.mxu0 0.0
    %145 = vmatprep.subr.mxu0 0.0
    %146 = vmatpush1.msra.mxu0 0.0
    %147 = vmatprep.subr.mxu0 0.0
    %148 = vmatpush1.msra.mxu0 0.0
    %149 = vmatprep.subr.mxu0 0.0
    %150 = vmatpush1.msra.mxu0 0.0
    %151 = vmatprep.subr.mxu0 0.0
    %152 = vmatpush1.msra.mxu0 %v119
    %153 = vmatprep.subr.mxu0 0.0
    %154 = vmatpush2.msra.mxu0 0.0
    %155 = vmatprep.subr.mxu0 0.0
    %156 = vmatpush2.msra.mxu0 0.0
    %157 = vmatprep.subr.mxu0 0.0
    %158 = vmatpush2.msra.mxu0 0.0
    %159 = vmatprep.subr.mxu0 0.0
    %160 = vmatpush2.msra.mxu0 0.0
    %161 = vmatprep.subr.mxu0 0.0
    %162 = vmatpush2.msra.mxu0 0.0
    %163 = vmatprep.subr.mxu0 0.0
    %164 = vmatpush2.msra.mxu0 0.0
    %165 = vmatprep.subr.mxu0 0.0
    %166 = vmatpush2.msra.mxu0 0.0
    %167 = vmatprep.subr.mxu0 0.0
    %168 = vmatpush2.msra.mxu0 0.0
    %169 = vmatprep.subr.mxu0 0.0
    %170 = vmatpush2.msra.mxu0 0.0
    %171 = vmatprep.subr.mxu0 0.0
    %172 = vmatpush2.msra.mxu0 0.0
    %173 = vmatprep.subr.mxu0 0.0
    %174 = vmatpush2.msra.mxu0 0.0
    %175 = vmatprep.subr.mxu0 0.0
    %176 = vmatpush2.msra.mxu0 0.0
    %177 = vmatprep.subr.mxu0 0.0
    %178 = vmatpush2.msra.mxu0 0.0
    %179 = vmatprep.subr.mxu0 0.0
    %180 = vmatpush2.msra.mxu0 0.0
    %181 = vmatprep.subr.mxu0 0.0
    %182 = vmatpush2.msra.mxu0 0.0
    %183 = vmatprep.subr.mxu0 0.0
    %184 = vmatpush2.msra.mxu0 0.0
    %185 = vmatprep.mubr.f32.mxu0 0.0
    %186 = vmatmul.mubr.f32.gmra.mxu0 %v115
    %v187 = vpop.f32.mrf.mxu0
    %v188 = vadd.f32 %v111, %v187
    %v189 = vpop.f32.mrf.mxu0
    %190 = vdwg.mxu0
    %191 = vst [vmem:[#allocation2] sm:$0xff] %v188
    // Predicated region
    $region18: #{quantum_inspired_linear.1} parent=1 // pred_check
      _
    $region19: #{quantum_inspired_linear.1} parent=1 // pred_check_branch
      %193 = sbr.rel (0) target = $region21
    $region20: #{quantum_inspired_linear.1} parent=1 // pred_region
      %s195 = ssub.s32 128, 128
      %196 = vsyncadd [#allocation3], %s195
      %s198 = sshll.u32 [#allocation2], 4
      %s199 = int_to_ptr.vmem [resolvable:$true] %s198
      %201 = dma.vmem_to_hbm [thread:$0]  %s199, 128, %s4, [#allocation3]
    $region21: #{quantum_inspired_linear.1} parent=1 // pred_fallthru
      _
    // Predicated region
    $region22: #{quantum_inspired_linear.1} parent=1 // pred_check
      _
    $region23: #{quantum_inspired_linear.1} parent=1 // pred_check_branch
      %203 = sbr.rel (0) target = $region25
    $region24: #{quantum_inspired_linear.1} parent=1 // pred_region
      %204 = dma.done [#allocation3], 128
    $region25: #{quantum_inspired_linear.1} parent=1 // pred_fallthru
      _
    %205 = vsyncpa [#allocation3], 1

</llo_original>
